<compile_context>
chip_gen: v7x
topology: tpu7x:2x2x1
jax: 0.10.0
libtpu: 0.0.40
codegen_flags: <defaults>
</compile_context>

<pallas_src>
import jax
import jax.numpy as jnp
from jax.experimental import pallas as pl
from jax.experimental.pallas import tpu as pltpu


# Above this size (and with an even leading dim) the copy is split into two
# DMAs so v7x's two TensorCores can both drive HBM.
_SPLIT_MIN_BYTES = 4 * 1024 * 1024


def _dma_copy_kernel(src_ref, dst_ref, sem):
    # Whole-array HBM -> HBM copy: one DMA descriptor, no VMEM bounce, no grid.
    cp = pltpu.make_async_copy(src_ref, dst_ref, sem)
    cp.start()
    cp.wait()


def _dma_copy_split2_kernel(src_ref, dst_ref, sem):
    # One half of the array per grid point. With dimension_semantics=
    # ("parallel",) the two points are sharded across v7x's 2 TensorCores,
    # so two concurrent HBM->HBM DMAs are in flight.
    i = pl.program_id(0)
    half = src_ref.shape[0] // 2
    sl = pl.ds(i * half, half)
    cp = pltpu.make_async_copy(src_ref.at[sl], dst_ref.at[sl], sem)
    cp.start()
    cp.wait()


def _hbm_copy(arr: jax.Array) -> jax.Array:
    """Copy `arr` (any shape/dtype) into a fresh buffer via raw HBM->HBM DMA."""
    nbytes = arr.size * jnp.dtype(arr.dtype).itemsize
    common = dict(
        out_shape=jax.ShapeDtypeStruct(arr.shape, arr.dtype),
        in_specs=[pl.BlockSpec(memory_space=pl.ANY)],
        out_specs=pl.BlockSpec(memory_space=pl.ANY),
        scratch_shapes=[pltpu.SemaphoreType.DMA(())],
        cost_estimate=pl.CostEstimate(
            flops=0, transcendentals=0, bytes_accessed=2 * nbytes
        ),
    )
    rows = arr.shape[0] if arr.ndim >= 1 else 1
    if nbytes >= _SPLIT_MIN_BYTES and rows >= 2 and rows % 2 == 0:
        return pl.pallas_call(
            _dma_copy_split2_kernel,
            grid=(2,),
            compiler_params=pltpu.CompilerParams(
                dimension_semantics=("parallel",)
            ),
            **common,
        )(arr)
    return pl.pallas_call(_dma_copy_kernel, **common)(arr)


def pallas_materialize(const: jax.Array) -> jax.Array:
    """Materialize a fresh copy of `const` via the Pallas DMA-copy kernel."""
    const = jnp.asarray(const)
    if const.ndim == 0:
        # DMA wants at least a 1-D buffer; round-trip through (1, 1).
        return _hbm_copy(const.reshape(1, 1)).reshape(())
    return _hbm_copy(const)


class FakeModule:
    """JAX/Pallas equivalent of the PyTorch `fake_module`."""

    def __init__(self, the_very_return, *, materialize_output: bool = False) -> None:
        self.the_very_return = jnp.asarray(the_very_return)
        self._materialize_output = materialize_output

    def __call__(self, *pargs, **kargs) -> jax.Array:
        # All positional / keyword arguments are ignored, matching PyTorch.
        if not self._materialize_output:
            # Fast path: zero HBM traffic, zero launch overhead.
            return self.the_very_return
        # Explicit-copy path: one (or two, on large arrays) HBM->HBM DMA.
        return pallas_materialize(self.the_very_return)


if __name__ == "__main__":
    key = jax.random.PRNGKey(0)
    k_const, k_x, k_big, k_odd = jax.random.split(key, 4)

    # Deterministic "parameter": the constant tensor the module always returns.
    the_very_return = jax.random.normal(k_const, (16, 256), dtype=jnp.float32)

    # Example (ignored) input, NCHW as in PyTorch conventions.
    x = jax.random.normal(k_x, (2, 4, 16, 16), dtype=jnp.float32)

    # --- Default fast path: no kernel, returns the stored constant. ---------
    module = FakeModule(the_very_return)
    out_fast = jax.block_until_ready(module(x, some_kwarg=123))
    assert out_fast.shape == the_very_return.shape
    assert out_fast.dtype == the_very_return.dtype
    assert bool(jnp.array_equal(out_fast, the_very_return))

    # --- Explicit-copy path: grid-less single HBM->HBM DMA. -----------------
    module_copy = FakeModule(the_very_return, materialize_output=True)
    out_copy = jax.block_until_ready(module_copy(x, some_kwarg=123))
    assert out_copy.shape == the_very_return.shape
    assert out_copy.dtype == the_very_return.dtype
    assert bool(jnp.array_equal(out_copy, the_very_return))

    # --- Large constant: exercises the 2-DMA parallel-grid split path. ------
    big_const = jax.random.normal(k_big, (2048, 1024), dtype=jnp.float32)  # 8 MiB
    big_out = jax.block_until_ready(pallas_materialize(big_const))
    assert bool(jnp.array_equal(big_out, big_const))

    # --- Awkward shapes/dtypes: raw DMA is shape/dtype agnostic. ------------
    odd_const = jax.random.normal(k_odd, (5, 7, 3), dtype=jnp.float32)
    odd_out = jax.block_until_ready(pallas_materialize(odd_const))
    assert bool(jnp.array_equal(odd_out, odd_const))

    bf16_const = the_very_return.astype(jnp.bfloat16)
    bf16_out = jax.block_until_ready(pallas_materialize(bf16_const))
    assert bf16_out.dtype == jnp.bfloat16
    assert bool(jnp.array_equal(bf16_out, bf16_const))

    scalar_const = jnp.float32(3.5)
    scalar_out = jax.block_until_ready(pallas_materialize(scalar_const))
    assert scalar_out.shape == ()
    assert bool(jnp.array_equal(scalar_out, scalar_const))

    print("KERNEL_OK")
</pallas_src>

<mosaic_0001>
module attributes {stable_mosaic.version = 11 : i64} {
  func.func @_dma_copy_kernel(%arg0: memref<16x256xf32, #tpu.memory_space<any>>, %arg1: memref<16x256xf32, #tpu.memory_space<any>>, %arg2: memref<!tpu.dma_semaphore, #tpu.memory_space<semaphore_mem>>) attributes {dimension_semantics = [], scalar_prefetch = 0 : i64, scratch_operands = 1 : i64, tpu.core_type = #tpu.core_type<tc>} {
    tpu.enqueue_dma source(%arg0 : memref<16x256xf32, #tpu.memory_space<any>>) target(%arg1 : memref<16x256xf32, #tpu.memory_space<any>>) target_semaphore(%arg2 : memref<!tpu.dma_semaphore, #tpu.memory_space<semaphore_mem>>)
    tpu.wait_dma2 semaphore(%arg2 : memref<!tpu.dma_semaphore, #tpu.memory_space<semaphore_mem>>) src(%arg0 : memref<16x256xf32, #tpu.memory_space<any>>) dst(%arg1 : memref<16x256xf32, #tpu.memory_space<any>>)
    return
  }
}

</mosaic_0001>

<llo_original>
// kernel: tpu_custom_call.1
$region0: #{tpu_custom_call.1}
  #allocation0 [shape = 'u32[]', space=smem, size = 0x4, offset = 0x4, fixed_abs, tag = 'smem constant byte address 0x4 - core index']
  #allocation1 [shape = 'u32[144,128]{1,0:T(1,128)}', space=vmem, size = 0x12000, scoped, tag = 'internal scratch']
  #allocation2 [shape = 's32[1]{0}', space=sflag, size = 0x4, scoped, tag = 'scratch operand']
  #allocation3 [shape = 's32[]', space=sflag, size = 0x4, offset = 0, fixed_abs, tag = 'sflag constant byte address 0x0 - dummy sync flag']
  #allocation4 [shape = 'u32[0]{0}', space=smem, size = 0, offset = 0, fixed_abs, tag = 'smem constant byte address 0x0 - null']
  %s0 = inlined_call_operand.hbm [shape: f32[16,256], index: 0, kind: input, shape index: {}]
  %s1 = inlined_call_operand.hbm [shape: f32[16,256], index: 1, kind: output, shape index: {}]
  %s2 = sld [smem:[#allocation0]]
  $region2: #{tpu_custom_call.1} parent=0
    _
  %s4 = ssub.s32 1, %s2
  %s5 = scalar_select 0, %s4, %s2
  %s7 = sshll.u32 1, 14
  %s8 = sxor.u32 4294967295, %s7
  %s11 = sshll.u32 3, 24
  %s12 = sxor.u32 4294967295, %s11
  %s13 = sand.u32 0, %s12
  %s15 = sor.u32 %s13, 0
  %18 = dma.general %s0, 512, %s1, [#allocation2], [#allocation3], [#allocation4], %s15, 0
  %s19 = smul.u32 8, 2
  %s20 = smul.u32 %s19, 2
  %s21 = sshll.u32 %s20, 4
  %22 = dma.done [#allocation2], %s21
  %23 = vsyncmov [#allocation2]
  %s24 = vpop.sfrf %23
  %p25 = scmp.eq.s32.totalorder %s24, 0
  %p26 = pneg %p25
  %28 = shalt.err (%p26)

</llo_original>
